<compile_context>
chip_gen: v6e
topology: v6e:2x2x1
jax: 0.10.0
libtpu: 0.0.40
codegen_flags: <defaults>
</compile_context>

<pallas_src>
import jax
import jax.numpy as jnp
from jax.experimental import pallas as pl
from jax.experimental.pallas import tpu as pltpu


def _indices_fc_kernel(x_ref, w_ref, b_ref, o_ref):
    # x_ref: (TB, Q), w_ref: (Q, 4K), b_ref: (1, 4K), o_ref: (TB, 4K)
    acc = jnp.dot(x_ref[...], w_ref[...], preferred_element_type=jnp.float32)
    o_ref[...] = (acc + b_ref[...].astype(jnp.float32)).astype(o_ref.dtype)


def init_indices_params(key, Q, K, dtype=jnp.float32):
    """Create fc parameters, storing the weight pre-transposed as (Q, 4K).

    (The one-time transpose happens here, at init, never in the forward path.)
    """
    kw, kb = jax.random.split(key)
    # Synthetic deterministic init in the PyTorch (out_f, in_f) layout ...
    w_pt = jax.random.normal(kw, (4 * K, Q), dtype=dtype) * 0.1
    bias = jax.random.normal(kb, (4 * K,), dtype=dtype) * 0.1
    # ... stored transposed so the kernel consumes it directly.
    w_t = jnp.asarray(w_pt.T)        # (Q, 4K)
    return w_t, bias


def _choose_tb(B, Q, out_f, in_itemsize, out_itemsize):
    """Shape-aware batch-tile selection (see header comment)."""
    # VMEM cost per output row for the double-buffered streamed blocks:
    # the (tb, Q) x block lane-pads Q up to a multiple of 128.
    q_pad = -(-Q // 128) * 128
    per_row = 2 * (q_pad * in_itemsize + out_f * out_itemsize)

    vmem_budget = 8 << 20                      # safe on v5e / v6e / v7x defaults
    tb_cap = max(8, (vmem_budget // per_row) // 8 * 8)
    tb_want = max(8, -(-(2 << 20) // (out_f * out_itemsize)))  # ~2 MiB out/step
    tb_cap = min(tb_cap, tb_want)

    if B <= max(tb_cap // 2, 8):
        # Small batch: one full-extent block (exempt from the (8,128) rule).
        return B

    # Large batch: even number of grid steps (v7x megacore), tile multiple of 8.
    n_steps = max(2, -(-B // tb_cap))
    n_steps += n_steps % 2
    tb = -(-B // n_steps)
    tb = -(-tb // 8) * 8
    return tb


def indices_forward(x, w_t, bias, *, tb=None, out_dtype=None,
                    allow_fast_path=True, fast_path_max_b=256):
    """Forward pass of Indices.

    Args:
      x:        (B, Q)     float32
      w_t:      (Q, 4*K)   float32  (fc weight, already transposed at init)
      bias:     (4*K,)     float32
      tb:       optional batch tile override (multiple of 8 when B > tb)
      out_dtype: output dtype (default: x.dtype). bf16 halves output HBM bytes.
      allow_fast_path: bypass pallas_call for tiny B (pure launch overhead).
    Returns:
      y:        (B, K, 4)  out_dtype
    """
    B, Q = x.shape
    Qw, out_f = w_t.shape
    assert Qw == Q
    assert out_f % 4 == 0
    assert out_f % 128 == 0, "keep the output lane dim a multiple of 128"
    out_dtype = x.dtype if out_dtype is None else out_dtype

    if allow_fast_path and B <= fast_path_max_b:
        # Tiny batch: a standalone kernel is pure launch overhead; let XLA fuse
        # the dot with neighbors instead.
        y = (jnp.dot(x, w_t, preferred_element_type=jnp.float32)
             + bias.astype(jnp.float32)).astype(out_dtype)
        return y.reshape(B, -1, 4)

    if tb is None:
        tb = _choose_tb(B, Q, out_f, x.dtype.itemsize,
                        jnp.dtype(out_dtype).itemsize)
    else:
        tb = min(tb, B)
    if B > tb:
        assert tb % 8 == 0, "batch tile must be a multiple of 8 when tiling"
    grid = (pl.cdiv(B, tb),)

    b2d = bias.reshape(1, out_f)     # lane-major bias row

    y = pl.pallas_call(
        _indices_fc_kernel,
        out_shape=jax.ShapeDtypeStruct((B, out_f), out_dtype),
        grid_spec=pl.GridSpec(
            grid=grid,
            in_specs=[
                # x: streamed per batch tile (pipelined across grid steps)
                pl.BlockSpec((tb, Q), lambda i: (i, 0)),
                # weight: VMEM-resident across all grid steps
                pl.BlockSpec((Q, out_f), lambda i: (0, 0)),
                # bias: VMEM-resident across all grid steps
                pl.BlockSpec((1, out_f), lambda i: (0, 0)),
            ],
            out_specs=pl.BlockSpec((tb, out_f), lambda i: (i, 0)),
        ),
        compiler_params=pltpu.CompilerParams(
            # batch rows are independent -> "parallel"; with an even grid the
            # work splits across both v7x TensorCores (neutral on v5e/v6e).
            dimension_semantics=("parallel",),
        ),
    )(x, w_t, b2d)

    # y.view(B, -1, 4) — plain-JAX reshape, kept outside the kernel so the
    # kernel's output store stays lane-dense.
    return y.reshape(B, -1, 4)


if __name__ == "__main__":
    # Small shapes consistent with the module: Q = args.indexs, K = args.n_filters
    B, Q, K = 2, 8, 32               # fc: Linear(8, 128) -> output (2, 32, 4)

    key = jax.random.PRNGKey(0)
    kx, kp, kx2, kx3 = jax.random.split(key, 4)

    x = jax.random.normal(kx, (B, Q), dtype=jnp.float32)
    w_t, bias = init_indices_params(kp, Q, K)     # transpose done once, at init
    ref = (x @ w_t + bias).reshape(B, -1, 4)

    # 1) Force the Pallas kernel at the module's native small shape.
    y = jax.block_until_ready(indices_forward(x, w_t, bias, allow_fast_path=False))
    assert y.shape == (B, K, 4)
    assert jnp.allclose(y, ref, atol=1e-5, rtol=1e-5)

    # 2) Default tiny-B fast path (plain fused dot, no kernel launch).
    y_fast = jax.block_until_ready(indices_forward(x, w_t, bias))
    assert jnp.allclose(y_fast, ref, atol=1e-5, rtol=1e-5)

    # 3) bf16 output variant (kernel is output-write bound; halves HBM bytes).
    y_bf16 = jax.block_until_ready(
        indices_forward(x, w_t, bias, allow_fast_path=False,
                        out_dtype=jnp.bfloat16))
    assert y_bf16.dtype == jnp.bfloat16
    assert jnp.allclose(y_bf16.astype(jnp.float32), ref, atol=3e-2, rtol=3e-2)

    # 4) Large batch: even grid (2 steps of 2048 rows), all stores unmasked.
    B2 = 4096
    x2 = jax.random.normal(kx2, (B2, Q), dtype=jnp.float32)
    y2 = jax.block_until_ready(indices_forward(x2, w_t, bias))
    ref2 = (x2 @ w_t + bias).reshape(B2, -1, 4)
    assert y2.shape == (B2, K, 4)
    assert jnp.allclose(y2, ref2, atol=1e-4, rtol=1e-4)

    # 5) Non-divisible batch: trailing partial tile (masked stores on the last
    #    grid step only) — correctness check of the tiled path's edge case.
    B3 = 5000
    x3 = jax.random.normal(kx3, (B3, Q), dtype=jnp.float32)
    y3 = jax.block_until_ready(indices_forward(x3, w_t, bias))
    ref3 = (x3 @ w_t + bias).reshape(B3, -1, 4)
    assert y3.shape == (B3, K, 4)
    assert jnp.allclose(y3, ref3, atol=1e-4, rtol=1e-4)

    print("KERNEL_OK")
</pallas_src>

<mosaic_0001>
module attributes {stable_mosaic.version = 11 : i64} {
  func.func @_indices_fc_kernel(%arg0: i32, %arg1: memref<2x8xf32, #tpu.memory_space<vmem>>, %arg2: memref<8x128xf32, #tpu.memory_space<vmem>>, %arg3: memref<1x128xf32, #tpu.memory_space<vmem>>, %arg4: memref<2x128xf32, #tpu.memory_space<vmem>>) attributes {dimension_semantics = [#tpu.dimension_semantics<parallel>], iteration_bounds = array<i64: 1>, scalar_prefetch = 0 : i64, scratch_operands = 0 : i64, tpu.core_type = #tpu.core_type<tc>, window_params = [{transform_indices = @transform_0, window_bounds = array<i64: 2, 8>}, {pipeline_mode = #tpu.pipeline_mode<synchronous>, transform_indices = @transform_1, window_bounds = array<i64: 8, 128>}, {pipeline_mode = #tpu.pipeline_mode<synchronous>, transform_indices = @transform_2, window_bounds = array<i64: 1, 128>}, {transform_indices = @transform_3, window_bounds = array<i64: 2, 128>}]} {
    %c0 = arith.constant 0 : index
    %c0_0 = arith.constant 0 : index
    %0 = vector.load %arg1[%c0, %c0_0] : memref<2x8xf32, #tpu.memory_space<vmem>>, vector<2x8xf32>
    %c0_1 = arith.constant 0 : index
    %c0_2 = arith.constant 0 : index
    %1 = vector.load %arg2[%c0_1, %c0_2] : memref<8x128xf32, #tpu.memory_space<vmem>>, vector<8x128xf32>
    %cst = arith.constant dense<0.000000e+00> : vector<2x128xf32>
    %2 = tpu.matmul %0, %1, %cst {dimension_numbers = #tpu.dot_dimension_numbers<[1], [0], [0], [1], [0, 0, 1, 1], [], []>} : vector<2x8xf32>, vector<8x128xf32>, vector<2x128xf32> -> vector<2x128xf32>
    %c0_3 = arith.constant 0 : index
    %c0_4 = arith.constant 0 : index
    %3 = vector.load %arg3[%c0_3, %c0_4] : memref<1x128xf32, #tpu.memory_space<vmem>>, vector<1x128xf32>
    %4 = vector.broadcast %3 : vector<1x128xf32> to vector<2x128xf32>
    %5 = arith.addf %2, %4 : vector<2x128xf32>
    %c0_5 = arith.constant 0 : index
    %c0_6 = arith.constant 0 : index
    %6 = vector.load %arg4[%c0_5, %c0_6] : memref<2x128xf32, #tpu.memory_space<vmem>>, vector<2x128xf32>
    tpu.vector_store %arg4[%c0_5, %c0_6], %5 {strides = array<i32>} : memref<2x128xf32, #tpu.memory_space<vmem>>, vector<2x128xf32>,
    return
  }
  func.func @transform_0(%arg0: i32) -> (i32, i32) {
    %c0_i32 = arith.constant 0 : i32
    %c0_i32_0 = arith.constant 0 : i32
    return %arg0, %c0_i32 : i32, i32
  }
  func.func @transform_1(%arg0: i32) -> (i32, i32) {
    %c0_i32 = arith.constant 0 : i32
    %c0_i32_0 = arith.constant 0 : i32
    %c0_i32_1 = arith.constant 0 : i32
    return %c0_i32, %c0_i32_0 : i32, i32
  }
  func.func @transform_2(%arg0: i32) -> (i32, i32) {
    %c0_i32 = arith.constant 0 : i32
    %c0_i32_0 = arith.constant 0 : i32
    %c0_i32_1 = arith.constant 0 : i32
    return %c0_i32, %c0_i32_0 : i32, i32
  }
  func.func @transform_3(%arg0: i32) -> (i32, i32) {
    %c0_i32 = arith.constant 0 : i32
    %c0_i32_0 = arith.constant 0 : i32
    return %arg0, %c0_i32 : i32, i32
  }
}

</mosaic_0001>

<llo_original>
// kernel: tpu_custom_call.1
$region0: #{tpu_custom_call.1}
  #allocation0 [shape = 'u32[]', space=smem, size = 0x4, offset = 0x4, fixed_abs, tag = 'smem constant byte address 0x4 - core index']
  #allocation1 [shape = 'u32[144,128]{1,0:T(1,128)}', space=vmem, size = 0x12000, scoped, tag = 'internal scratch']
  %s0 = inlined_call_operand.hbm [shape: f32[2,8], index: 0, kind: input, shape index: {}]
  %s1 = inlined_call_operand.hbm [shape: f32[8,128], index: 1, kind: input, shape index: {}]
  %s2 = inlined_call_operand.vmem [shape: f32[1,128], index: 2, kind: input, shape index: {}]
  %s3 = inlined_call_operand.hbm [shape: f32[2,128], index: 3, kind: output, shape index: {}]
  %s4 = sld [smem:[#allocation0]]
  $region30: #{tpu_custom_call.1} parent=0
    _
  %s6 = ssub.s32 1, %s4
  %s7 = scalar_select 0, %s6, %s4
  $region1: #{tpu_custom_call.1} parent=0
    #allocation2 [shape = 'u8[1024]{0}', space=vmem, size = 0x400, scoped, tag = 'input window, operand 0, single buffered']
    #allocation3 [shape = 's32[1]{0}', space=sflag, size = 0x4, scoped, tag = 'scoped memory for tpu_custom_call.1']
    #allocation4 [shape = 's32[1]{0}', space=sflag, size = 0x4, scoped, tag = 'scoped memory for tpu_custom_call.1']
    #allocation5 [shape = 'u8[4096]{0}', space=vmem, size = 0x1000, scoped, tag = 'input window, operand 1, single buffered']
    #allocation6 [shape = 's32[1]{0}', space=sflag, size = 0x4, scoped, tag = 'scoped memory for tpu_custom_call.1']
    #allocation7 [shape = 'u8[1024]{0}', space=vmem, size = 0x400, scoped, tag = 'output window, operand 0, single buffered']
    %8 = vsyncpa [#allocation3], 0
    %9 = vsyncpa [#allocation6], 0
    %10 = vsyncpa [#allocation4], 0
    // Predicated region
    $region2: #{tpu_custom_call.1} parent=1 // pred_check
      _
    $region3: #{tpu_custom_call.1} parent=1 // pred_check_branch
      %12 = sbr.rel (0) target = $region5
    $region4: #{tpu_custom_call.1} parent=1 // pred_region
      %s14 = ssub.s32 32, 32
      %15 = vsyncadd [#allocation3], %s14
      %s17 = sshll.u32 [#allocation2], 4
      %s18 = int_to_ptr.vmem [resolvable:$true] %s17
      %20 = dma.hbm_to_vmem [thread:$0]  %s0, 32, %s18, [#allocation3]
    $region5: #{tpu_custom_call.1} parent=1 // pred_fallthru
      _
    // Predicated region
    $region6: #{tpu_custom_call.1} parent=1 // pred_check
      _
    $region7: #{tpu_custom_call.1} parent=1 // pred_check_branch
      %22 = sbr.rel (0) target = $region9
    $region8: #{tpu_custom_call.1} parent=1 // pred_region
      %s24 = ssub.s32 128, 128
      %25 = vsyncadd [#allocation6], %s24
      %s27 = sshll.u32 [#allocation5], 4
      %s28 = int_to_ptr.vmem [resolvable:$true] %s27
      %30 = dma.hbm_to_vmem [thread:$0]  %s1, 128, %s28, [#allocation6]
    $region9: #{tpu_custom_call.1} parent=1 // pred_fallthru
      _
    // Predicated region
    $region10: #{tpu_custom_call.1} parent=1 // pred_check
      _
    $region11: #{tpu_custom_call.1} parent=1 // pred_check_branch
      %32 = sbr.rel (0) target = $region13
    $region12: #{tpu_custom_call.1} parent=1 // pred_region
      _
    $region13: #{tpu_custom_call.1} parent=1 // pred_fallthru
      _
    // Predicated region
    $region14: #{tpu_custom_call.1} parent=1 // pred_check
      _
    $region15: #{tpu_custom_call.1} parent=1 // pred_check_branch
      %34 = sbr.rel (0) target = $region17
    $region16: #{tpu_custom_call.1} parent=1 // pred_region
      %35 = dma.done [#allocation3], 32
    $region17: #{tpu_custom_call.1} parent=1 // pred_fallthru
      _
    // Predicated region
    $region18: #{tpu_custom_call.1} parent=1 // pred_check
      _
    $region19: #{tpu_custom_call.1} parent=1 // pred_check_branch
      %37 = sbr.rel (0) target = $region21
    $region20: #{tpu_custom_call.1} parent=1 // pred_region
      %38 = dma.done [#allocation6], 128
    $region21: #{tpu_custom_call.1} parent=1 // pred_fallthru
      _
    %v39 = vld [vmem:[#allocation2] sm:$0x3]
    %v40 = vld [vmem:[#allocation5] sm:$0xff]
    %v41 = vld [vmem:[%s2] sm:$0x1]
    %v43 = vlaneseq
    %v44 = vshrl.u32 %v43, 7
    %v45 = vsub.s32 0, %v44
    %v46 = vrot.slane %v41, %v45
    %vm48 = vcmask 64512
    %v50 = vsel %vm48, %v39, 0
    %52 = vmatprep.subr.mxu0 0.0
    %53 = vmatpush1.msra.mxu0 0.0
    %54 = vmatprep.subr.mxu0 0.0
    %55 = vmatpush1.msra.mxu0 0.0
    %56 = vmatprep.subr.mxu0 0.0
    %57 = vmatpush1.msra.mxu0 0.0
    %58 = vmatprep.subr.mxu0 0.0
    %59 = vmatpush1.msra.mxu0 0.0
    %60 = vmatprep.subr.mxu0 0.0
    %61 = vmatpush1.msra.mxu0 0.0
    %62 = vmatprep.subr.mxu0 0.0
    %63 = vmatpush1.msra.mxu0 0.0
    %64 = vmatprep.subr.mxu0 0.0
    %65 = vmatpush1.msra.mxu0 0.0
    %66 = vmatprep.subr.mxu0 0.0
    %67 = vmatpush1.msra.mxu0 0.0
    %68 = vmatprep.subr.mxu0 0.0
    %69 = vmatpush1.msra.mxu0 0.0
    %70 = vmatprep.subr.mxu0 0.0
    %71 = vmatpush1.msra.mxu0 0.0
    %72 = vmatprep.subr.mxu0 0.0
    %73 = vmatpush1.msra.mxu0 0.0
    %74 = vmatprep.subr.mxu0 0.0
    %75 = vmatpush1.msra.mxu0 0.0
    %76 = vmatprep.subr.mxu0 0.0
    %77 = vmatpush1.msra.mxu0 0.0
    %78 = vmatprep.subr.mxu0 0.0
    %79 = vmatpush1.msra.mxu0 0.0
    %80 = vmatprep.subr.mxu0 0.0
    %81 = vmatpush1.msra.mxu0 0.0
    %82 = vmatprep.subr.mxu0 0.0
    %83 = vmatpush1.msra.mxu0 %v40
    %84 = vmatprep.subr.mxu0 0.0
    %85 = vmatpush2.msra.mxu0 0.0
    %86 = vmatprep.subr.mxu0 0.0
    %87 = vmatpush2.msra.mxu0 0.0
    %88 = vmatprep.subr.mxu0 0.0
    %89 = vmatpush2.msra.mxu0 0.0
    %90 = vmatprep.subr.mxu0 0.0
    %91 = vmatpush2.msra.mxu0 0.0
    %92 = vmatprep.subr.mxu0 0.0
    %93 = vmatpush2.msra.mxu0 0.0
    %94 = vmatprep.subr.mxu0 0.0
    %95 = vmatpush2.msra.mxu0 0.0
    %96 = vmatprep.subr.mxu0 0.0
    %97 = vmatpush2.msra.mxu0 0.0
    %98 = vmatprep.subr.mxu0 0.0
    %99 = vmatpush2.msra.mxu0 0.0
    %100 = vmatprep.subr.mxu0 0.0
    %101 = vmatpush2.msra.mxu0 0.0
    %102 = vmatprep.subr.mxu0 0.0
    %103 = vmatpush2.msra.mxu0 0.0
    %104 = vmatprep.subr.mxu0 0.0
    %105 = vmatpush2.msra.mxu0 0.0
    %106 = vmatprep.subr.mxu0 0.0
    %107 = vmatpush2.msra.mxu0 0.0
    %108 = vmatprep.subr.mxu0 0.0
    %109 = vmatpush2.msra.mxu0 0.0
    %110 = vmatprep.subr.mxu0 0.0
    %111 = vmatpush2.msra.mxu0 0.0
    %112 = vmatprep.subr.mxu0 0.0
    %113 = vmatpush2.msra.mxu0 0.0
    %114 = vmatprep.subr.mxu0 0.0
    %115 = vmatpush2.msra.mxu0 0.0
    %116 = vmatprep.mubr.f32.mxu0 0.0
    %117 = vmatmul.mubr.f32.gmra.mxu0 %v50
    %v118 = vpop.f32.mrf.mxu0
    %v119 = vadd.f32 %v46, %v118
    %v120 = vpop.f32.mrf.mxu0
    %121 = vdwg.mxu0
    %122 = vst [vmem:[#allocation7] sm:$0x3] %v119
    // Predicated region
    $region22: #{tpu_custom_call.1} parent=1 // pred_check
      _
    $region23: #{tpu_custom_call.1} parent=1 // pred_check_branch
      %124 = sbr.rel (0) target = $region25
    $region24: #{tpu_custom_call.1} parent=1 // pred_region
      %s126 = ssub.s32 32, 32
      %127 = vsyncadd [#allocation4], %s126
      %s129 = sshll.u32 [#allocation7], 4
      %s130 = int_to_ptr.vmem [resolvable:$true] %s129
      %132 = dma.vmem_to_hbm [thread:$0]  %s130, 32, %s3, [#allocation4]
    $region25: #{tpu_custom_call.1} parent=1 // pred_fallthru
      _
    // Predicated region
    $region26: #{tpu_custom_call.1} parent=1 // pred_check
      _
    $region27: #{tpu_custom_call.1} parent=1 // pred_check_branch
      %134 = sbr.rel (0) target = $region29
    $region28: #{tpu_custom_call.1} parent=1 // pred_region
      %135 = dma.done [#allocation4], 32
    $region29: #{tpu_custom_call.1} parent=1 // pred_fallthru
      _
    %136 = vsyncpa [#allocation3], 1
    %137 = vsyncpa [#allocation6], 1
    %138 = vsyncpa [#allocation4], 1

</llo_original>
